<compile_context>
chip_gen: v6e
topology: v6e:2x2x1
jax: 0.10.0
libtpu: 0.0.40
codegen_flags: <defaults>
</compile_context>

<pallas_src>
import jax
import jax.numpy as jnp
from jax.experimental import pallas as pl
from jax.experimental.pallas import tpu as pltpu


def _round_up(n, m):
    return ((n + m - 1) // m) * m


def _sigmoid(z):
    # tanh-form sigmoid: one EUP push + fused mul-add, no exp overflow / divide.
    return 0.5 * jnp.tanh(0.5 * z) + 0.5


def _mlp_kernel(x_ref, w1_ref, b1_ref, w2_ref, b2_ref, w3_ref, b3_ref, o_ref):
    """Fused forward: three (MXU matmul + bias + sigmoid) stages on one batch tile."""

    def layer(h, w_ref, b_ref):
        # astype is a no-op when h already matches the weight dtype (bf16 path).
        z = jnp.dot(h.astype(w_ref.dtype), w_ref[...],
                    preferred_element_type=jnp.float32) + b_ref[...]
        return _sigmoid(z)

    h = x_ref[...]
    h = layer(h, w1_ref, b1_ref)
    h = layer(h, w2_ref, b2_ref)
    h = layer(h, w3_ref, b3_ref)
    o_ref[...] = h.astype(o_ref.dtype)


def init_params(key, input_dim, hidden_dims, output_dim):
    """Deterministic init mirroring torch.nn.Linear: U(-1/sqrt(fan_in), 1/sqrt(fan_in)).

    Weights are stored [in_features, out_features] (transposed vs. PyTorch) so
    the kernel/reference compute x @ W directly (== PyTorch x @ W.T + b).
    """
    dims = [input_dim, hidden_dims[0], hidden_dims[1], output_dim]
    params = {}
    for i in range(3):
        fan_in, fan_out = dims[i], dims[i + 1]
        key, kw, kb = jax.random.split(key, 3)
        bound = 1.0 / jnp.sqrt(jnp.asarray(fan_in, jnp.float32))
        params[f"w{i+1}"] = jax.random.uniform(
            kw, (fan_in, fan_out), jnp.float32, minval=-bound, maxval=bound)
        params[f"b{i+1}"] = jax.random.uniform(
            kb, (1, fan_out), jnp.float32, minval=-bound, maxval=bound)
    return params


def pad_params(params, input_dim, hidden_dims, output_dim,
               compute_dtype=jnp.bfloat16):
    """Zero-pad every output-feature (lane) dim to a multiple of 128.

    The input dim of layer i+1 is padded to match the padded output dim of
    layer i (extra rows are zero, so the 0.5's in padded hidden lanes cancel).
    Weights are stored in `compute_dtype` (bf16 default; f32 debug); biases f32.
    """
    logical = [input_dim, hidden_dims[0], hidden_dims[1], output_dim]
    padded = [input_dim] + [_round_up(d, 128) for d in logical[1:]]
    out = {}
    for i in range(3):
        w, b = params[f"w{i+1}"], params[f"b{i+1}"]
        wp = jnp.zeros((padded[i], padded[i + 1]), compute_dtype)
        wp = wp.at[:logical[i], :logical[i + 1]].set(w.astype(compute_dtype))
        bp = jnp.zeros((1, padded[i + 1]), jnp.float32)
        bp = bp.at[:, :logical[i + 1]].set(b)
        out[f"w{i+1}"], out[f"b{i+1}"] = wp, bp
    return out


def nn_img2num_forward(x, padded_params, *, tile_b=1024, out_dtype=jnp.float32):
    """Fused 3-layer MLP forward.

    x: [B, input_dim]; bf16 recommended (the kernel is HBM-bound on this stream).
    Returns the lane-padded activations [B, round_up(output_dim, 128)]; the
    consumer slices [:, :output_dim] lazily (no standalone post-kernel slice).
    """
    w1, b1 = padded_params["w1"], padded_params["b1"]
    w2, b2 = padded_params["w2"], padded_params["b2"]
    w3, b3 = padded_params["w3"], padded_params["b3"]
    B, in_dim = x.shape
    out_pad = w3.shape[1]

    # Batch tile: large (default 1024, multiple of 256) to amortize the
    # ~0.35 us/step overhead and maximize HBM efficiency, but never collapse
    # to a single grid step for B > 256 so the "parallel" axis shards across
    # v7x's two TensorCores.
    if B <= 256:
        tb = B                                            # single tile, tiny batch
    else:
        tb = min(tile_b, _round_up(pl.cdiv(B, 2), 256))   # >= 2 grid steps
    grid = (pl.cdiv(B, tb),)

    def resident(a):
        # Constant index_map (VMEM-resident across grid steps) + single buffer.
        return pl.BlockSpec(a.shape, lambda i: (0, 0),
                            pipeline_mode=pl.Buffered(1))

    itemsize = lambda a: jnp.dtype(a.dtype).itemsize
    weight_bytes = sum(int(w.size) * itemsize(w) for w in (w1, b1, w2, b2, w3, b3))
    est_bytes = (2 * tb * in_dim * itemsize(x)                      # x double-buffer
                 + 2 * tb * out_pad * jnp.dtype(out_dtype).itemsize  # out double-buffer
                 + weight_bytes)                                     # resident weights
    # Explicit scoped-VMEM request (v5e defaults to only 16 MiB), with headroom.
    vmem_limit = int(min(max(2 * est_bytes, 32 * 1024 * 1024), 64 * 1024 * 1024))

    return pl.pallas_call(
        _mlp_kernel,
        out_shape=jax.ShapeDtypeStruct((B, out_pad), out_dtype),
        grid=grid,
        in_specs=[
            pl.BlockSpec((tb, in_dim), lambda i: (i, 0)),
            resident(w1), resident(b1),
            resident(w2), resident(b2),
            resident(w3), resident(b3),
        ],
        out_specs=pl.BlockSpec((tb, out_pad), lambda i: (i, 0)),
        compiler_params=pltpu.CompilerParams(
            dimension_semantics=("parallel",),
            vmem_limit_bytes=vmem_limit),
    )(x, w1, b1, w2, b2, w3, b3)


def _reference_forward(x, params):
    """Pure-JAX reference (unpadded logical f32 params)."""
    h = jax.nn.sigmoid(x @ params["w1"] + params["b1"])
    h = jax.nn.sigmoid(h @ params["w2"] + params["b2"])
    return jax.nn.sigmoid(h @ params["w3"] + params["b3"])


if __name__ == "__main__":
    # MNIST-style flattened-image MLP shapes implied by the module.
    input_dim, hidden_dims, output_dim = 784, (128, 64), 10

    key = jax.random.PRNGKey(0)
    key, kx_small, kx_big = jax.random.split(key, 3)
    params = init_params(key, input_dim, hidden_dims, output_dim)

    # Production path: bf16 weights (mandatory on v5e, good everywhere).
    params_bf16 = pad_params(params, input_dim, hidden_dims, output_dim,
                             compute_dtype=jnp.bfloat16)
    # Debug path: f32 weights for a tight numerical check.
    params_f32 = pad_params(params, input_dim, hidden_dims, output_dim,
                            compute_dtype=jnp.float32)

    # 1) Tiny batch -> single-tile path, f32 debug weights, tight tolerance.
    x_small = jax.random.normal(kx_small, (8, input_dim), jnp.float32)
    out_small = jax.block_until_ready(nn_img2num_forward(x_small, params_f32))
    logits_small = out_small[:, :output_dim]          # consumer-side lazy slice
    ref_small = _reference_forward(x_small, params)
    assert logits_small.shape == (8, output_dim)
    assert jnp.allclose(logits_small, ref_small, atol=1e-4, rtol=1e-4), \
        "small-batch f32 path mismatch vs reference"

    # 2) Mid batch (B=300): >=2 grid steps (megacore) + ragged last tile,
    #    bf16 x stream + bf16 weights (the production path).
    B = 300
    x_big_f32 = jax.random.normal(kx_big, (B, input_dim), jnp.float32)
    x_big = x_big_f32.astype(jnp.bfloat16)            # producer stores images as bf16
    out_big = jax.block_until_ready(
        nn_img2num_forward(x_big, params_bf16, tile_b=1024))
    logits_big = out_big[:, :output_dim]              # consumer-side lazy slice
    ref_big = _reference_forward(x_big.astype(jnp.float32), params)
    assert logits_big.shape == (B, output_dim)
    assert jnp.allclose(logits_big, ref_big, atol=5e-2), \
        "gridded bf16 path mismatch vs reference"

    # TODO(synk): the PyTorch module's train() SGD/MSE loop and plot_loss() are
    # host-side training/plotting utilities, not part of the forward pass, and
    # are not translated.
    print("KERNEL_OK")
</pallas_src>

<mosaic_0001>
module attributes {stable_mosaic.version = 11 : i64} {
  func.func @_mlp_kernel(%arg0: i32, %arg1: memref<8x784xf32, #tpu.memory_space<vmem>>, %arg2: memref<784x128xf32, #tpu.memory_space<vmem>>, %arg3: memref<1x128xf32, #tpu.memory_space<vmem>>, %arg4: memref<128x128xf32, #tpu.memory_space<vmem>>, %arg5: memref<1x128xf32, #tpu.memory_space<vmem>>, %arg6: memref<128x128xf32, #tpu.memory_space<vmem>>, %arg7: memref<1x128xf32, #tpu.memory_space<vmem>>, %arg8: memref<8x128xf32, #tpu.memory_space<vmem>>) attributes {dimension_semantics = [#tpu.dimension_semantics<parallel>], iteration_bounds = array<i64: 1>, scalar_prefetch = 0 : i64, scratch_operands = 0 : i64, tpu.core_type = #tpu.core_type<tc>, window_params = [{transform_indices = @transform_0, window_bounds = array<i64: 8, 784>}, {pipeline_mode = #tpu.pipeline_mode<synchronous>, transform_indices = @transform_1, window_bounds = array<i64: 784, 128>}, {pipeline_mode = #tpu.pipeline_mode<synchronous>, transform_indices = @transform_2, window_bounds = array<i64: 1, 128>}, {pipeline_mode = #tpu.pipeline_mode<synchronous>, transform_indices = @transform_3, window_bounds = array<i64: 128, 128>}, {pipeline_mode = #tpu.pipeline_mode<synchronous>, transform_indices = @transform_4, window_bounds = array<i64: 1, 128>}, {pipeline_mode = #tpu.pipeline_mode<synchronous>, transform_indices = @transform_5, window_bounds = array<i64: 128, 128>}, {pipeline_mode = #tpu.pipeline_mode<synchronous>, transform_indices = @transform_6, window_bounds = array<i64: 1, 128>}, {transform_indices = @transform_7, window_bounds = array<i64: 8, 128>}]} {
    %c0 = arith.constant 0 : index
    %c0_0 = arith.constant 0 : index
    %0 = vector.load %arg1[%c0, %c0_0] : memref<8x784xf32, #tpu.memory_space<vmem>>, vector<8x784xf32>
    %c0_1 = arith.constant 0 : index
    %c0_2 = arith.constant 0 : index
    %1 = vector.load %arg2[%c0_1, %c0_2] : memref<784x128xf32, #tpu.memory_space<vmem>>, vector<784x128xf32>
    %cst = arith.constant dense<0.000000e+00> : vector<8x128xf32>
    %2 = tpu.matmul %0, %1, %cst {dimension_numbers = #tpu.dot_dimension_numbers<[1], [0], [0], [1], [0, 0, 1, 1], [], []>} : vector<8x784xf32>, vector<784x128xf32>, vector<8x128xf32> -> vector<8x128xf32>
    %c0_3 = arith.constant 0 : index
    %c0_4 = arith.constant 0 : index
    %3 = vector.load %arg3[%c0_3, %c0_4] : memref<1x128xf32, #tpu.memory_space<vmem>>, vector<1x128xf32>
    %4 = vector.broadcast %3 : vector<1x128xf32> to vector<8x128xf32>
    %5 = arith.addf %2, %4 : vector<8x128xf32>
    %cst_5 = arith.constant 5.000000e-01 : f32
    %6 = vector.broadcast %cst_5 : f32 to vector<8x128xf32>
    %7 = arith.mulf %6, %5 : vector<8x128xf32>
    %8 = math.tanh %7 : vector<8x128xf32>
    %cst_6 = arith.constant 5.000000e-01 : f32
    %9 = vector.broadcast %cst_6 : f32 to vector<8x128xf32>
    %10 = arith.mulf %9, %8 : vector<8x128xf32>
    %cst_7 = arith.constant 5.000000e-01 : f32
    %11 = vector.broadcast %cst_7 : f32 to vector<8x128xf32>
    %12 = arith.addf %10, %11 : vector<8x128xf32>
    %c0_8 = arith.constant 0 : index
    %c0_9 = arith.constant 0 : index
    %13 = vector.load %arg4[%c0_8, %c0_9] : memref<128x128xf32, #tpu.memory_space<vmem>>, vector<128x128xf32>
    %cst_10 = arith.constant dense<0.000000e+00> : vector<8x128xf32>
    %14 = tpu.matmul %12, %13, %cst_10 {dimension_numbers = #tpu.dot_dimension_numbers<[1], [0], [0], [1], [0, 0, 1, 1], [], []>} : vector<8x128xf32>, vector<128x128xf32>, vector<8x128xf32> -> vector<8x128xf32>
    %c0_11 = arith.constant 0 : index
    %c0_12 = arith.constant 0 : index
    %15 = vector.load %arg5[%c0_11, %c0_12] : memref<1x128xf32, #tpu.memory_space<vmem>>, vector<1x128xf32>
    %16 = vector.broadcast %15 : vector<1x128xf32> to vector<8x128xf32>
    %17 = arith.addf %14, %16 : vector<8x128xf32>
    %cst_13 = arith.constant 5.000000e-01 : f32
    %18 = vector.broadcast %cst_13 : f32 to vector<8x128xf32>
    %19 = arith.mulf %18, %17 : vector<8x128xf32>
    %20 = math.tanh %19 : vector<8x128xf32>
    %cst_14 = arith.constant 5.000000e-01 : f32
    %21 = vector.broadcast %cst_14 : f32 to vector<8x128xf32>
    %22 = arith.mulf %21, %20 : vector<8x128xf32>
    %cst_15 = arith.constant 5.000000e-01 : f32
    %23 = vector.broadcast %cst_15 : f32 to vector<8x128xf32>
    %24 = arith.addf %22, %23 : vector<8x128xf32>
    %c0_16 = arith.constant 0 : index
    %c0_17 = arith.constant 0 : index
    %25 = vector.load %arg6[%c0_16, %c0_17] : memref<128x128xf32, #tpu.memory_space<vmem>>, vector<128x128xf32>
    %cst_18 = arith.constant dense<0.000000e+00> : vector<8x128xf32>
    %26 = tpu.matmul %24, %25, %cst_18 {dimension_numbers = #tpu.dot_dimension_numbers<[1], [0], [0], [1], [0, 0, 1, 1], [], []>} : vector<8x128xf32>, vector<128x128xf32>, vector<8x128xf32> -> vector<8x128xf32>
    %c0_19 = arith.constant 0 : index
    %c0_20 = arith.constant 0 : index
    %27 = vector.load %arg7[%c0_19, %c0_20] : memref<1x128xf32, #tpu.memory_space<vmem>>, vector<1x128xf32>
    %28 = vector.broadcast %27 : vector<1x128xf32> to vector<8x128xf32>
    %29 = arith.addf %26, %28 : vector<8x128xf32>
    %cst_21 = arith.constant 5.000000e-01 : f32
    %30 = vector.broadcast %cst_21 : f32 to vector<8x128xf32>
    %31 = arith.mulf %30, %29 : vector<8x128xf32>
    %32 = math.tanh %31 : vector<8x128xf32>
    %cst_22 = arith.constant 5.000000e-01 : f32
    %33 = vector.broadcast %cst_22 : f32 to vector<8x128xf32>
    %34 = arith.mulf %33, %32 : vector<8x128xf32>
    %cst_23 = arith.constant 5.000000e-01 : f32
    %35 = vector.broadcast %cst_23 : f32 to vector<8x128xf32>
    %36 = arith.addf %34, %35 : vector<8x128xf32>
    %c0_24 = arith.constant 0 : index
    %c0_25 = arith.constant 0 : index
    %37 = vector.load %arg8[%c0_24, %c0_25] : memref<8x128xf32, #tpu.memory_space<vmem>>, vector<8x128xf32>
    tpu.vector_store %arg8[%c0_24, %c0_25], %36 {strides = array<i32>} : memref<8x128xf32, #tpu.memory_space<vmem>>, vector<8x128xf32>,
    return
  }
  func.func @transform_0(%arg0: i32) -> (i32, i32) {
    %c0_i32 = arith.constant 0 : i32
    %c0_i32_0 = arith.constant 0 : i32
    return %arg0, %c0_i32 : i32, i32
  }
  func.func @transform_1(%arg0: i32) -> (i32, i32) {
    %c0_i32 = arith.constant 0 : i32
    %c0_i32_0 = arith.constant 0 : i32
    %c0_i32_1 = arith.constant 0 : i32
    return %c0_i32, %c0_i32_0 : i32, i32
  }
  func.func @transform_2(%arg0: i32) -> (i32, i32) {
    %c0_i32 = arith.constant 0 : i32
    %c0_i32_0 = arith.constant 0 : i32
    %c0_i32_1 = arith.constant 0 : i32
    return %c0_i32, %c0_i32_0 : i32, i32
  }
  func.func @transform_3(%arg0: i32) -> (i32, i32) {
    %c0_i32 = arith.constant 0 : i32
    %c0_i32_0 = arith.constant 0 : i32
    %c0_i32_1 = arith.constant 0 : i32
    return %c0_i32, %c0_i32_0 : i32, i32
  }
  func.func @transform_4(%arg0: i32) -> (i32, i32) {
    %c0_i32 = arith.constant 0 : i32
    %c0_i32_0 = arith.constant 0 : i32
    %c0_i32_1 = arith.constant 0 : i32
    return %c0_i32, %c0_i32_0 : i32, i32
  }
  func.func @transform_5(%arg0: i32) -> (i32, i32) {
    %c0_i32 = arith.constant 0 : i32
    %c0_i32_0 = arith.constant 0 : i32
    %c0_i32_1 = arith.constant 0 : i32
    return %c0_i32, %c0_i32_0 : i32, i32
  }
  func.func @transform_6(%arg0: i32) -> (i32, i32) {
    %c0_i32 = arith.constant 0 : i32
    %c0_i32_0 = arith.constant 0 : i32
    %c0_i32_1 = arith.constant 0 : i32
    return %c0_i32, %c0_i32_0 : i32, i32
  }
  func.func @transform_7(%arg0: i32) -> (i32, i32) {
    %c0_i32 = arith.constant 0 : i32
    %c0_i32_0 = arith.constant 0 : i32
    return %arg0, %c0_i32 : i32, i32
  }
}

</mosaic_0001>

<llo_original>
// kernel: tpu_custom_call.1
$region0: #{tpu_custom_call.1}
  #allocation0 [shape = 'u32[]', space=smem, size = 0x4, offset = 0x4, fixed_abs, tag = 'smem constant byte address 0x4 - core index']
  #allocation1 [shape = 'u32[144,128]{1,0:T(1,128)}', space=vmem, size = 0x12000, scoped, tag = 'internal scratch']
  %s0 = inlined_call_operand.hbm [shape: f32[8,784], index: 0, kind: input, shape index: {}]
  %s1 = inlined_call_operand.hbm [shape: f32[784,128], index: 1, kind: input, shape index: {}]
  %s2 = inlined_call_operand.vmem [shape: f32[1,128], index: 2, kind: input, shape index: {}]
  %s3 = inlined_call_operand.hbm [shape: f32[128,128], index: 3, kind: input, shape index: {}]
  %s4 = inlined_call_operand.vmem [shape: f32[1,128], index: 4, kind: input, shape index: {}]
  %s5 = inlined_call_operand.hbm [shape: f32[128,128], index: 5, kind: input, shape index: {}]
  %s6 = inlined_call_operand.vmem [shape: f32[1,128], index: 6, kind: input, shape index: {}]
  %s7 = inlined_call_operand.hbm [shape: f32[8,128], index: 7, kind: output, shape index: {}]
  %s8 = sld [smem:[#allocation0]]
  $region54: #{tpu_custom_call.1} parent=0
    _
  %s10 = ssub.s32 1, %s8
  %s11 = scalar_select 0, %s10, %s8
  $region1: #{tpu_custom_call.1} parent=0
    #allocation2 [shape = 'u8[28672]{0}', space=vmem, size = 0x7000, scoped, tag = 'input window, operand 0, single buffered']
    #allocation3 [shape = 's32[1]{0}', space=sflag, size = 0x4, scoped, tag = 'scoped memory for tpu_custom_call.1']
    #allocation4 [shape = 's32[1]{0}', space=sflag, size = 0x4, scoped, tag = 'scoped memory for tpu_custom_call.1']
    #allocation5 [shape = 'u8[401408]{0}', space=vmem, size = 0x62000, scoped, tag = 'input window, operand 1, single buffered']
    #allocation6 [shape = 's32[1]{0}', space=sflag, size = 0x4, scoped, tag = 'scoped memory for tpu_custom_call.1']
    #allocation7 [shape = 'u8[65536]{0}', space=vmem, size = 0x10000, scoped, tag = 'input window, operand 3, single buffered']
    #allocation8 [shape = 'u8[65536]{0}', space=vmem, size = 0x10000, scoped, tag = 'input window, operand 5, single buffered']
    #allocation9 [shape = 's32[1]{0}', space=sflag, size = 0x4, scoped, tag = 'scoped memory for tpu_custom_call.1']
    #allocation10 [shape = 'u8[4096]{0}', space=vmem, size = 0x1000, scoped, tag = 'output window, operand 0, single buffered']
    %12 = vsyncpa [#allocation3], 0
    %13 = vsyncpa [#allocation6], 0
    %14 = vsyncpa [#allocation9], 0
    %15 = vsyncpa [#allocation4], 0
    // Predicated region
    $region2: #{tpu_custom_call.1} parent=1 // pred_check
      _
    $region3: #{tpu_custom_call.1} parent=1 // pred_check_branch
      %17 = sbr.rel (0) target = $region5
    $region4: #{tpu_custom_call.1} parent=1 // pred_region
      %s19 = ssub.s32 896, 896
      %20 = vsyncadd [#allocation3], %s19
      %s22 = sshll.u32 [#allocation2], 4
      %s23 = int_to_ptr.vmem [resolvable:$true] %s22
      %25 = dma.hbm_to_vmem [thread:$0]  %s0, 896, %s23, [#allocation3]
    $region5: #{tpu_custom_call.1} parent=1 // pred_fallthru
      _
    // Predicated region
    $region6: #{tpu_custom_call.1} parent=1 // pred_check
      _
    $region7: #{tpu_custom_call.1} parent=1 // pred_check_branch
      %27 = sbr.rel (0) target = $region9
    $region8: #{tpu_custom_call.1} parent=1 // pred_region
      %s29 = ssub.s32 12544, 12544
      %30 = vsyncadd [#allocation6], %s29
      %s31 = sshll.u32 [#allocation5], 4
      %s32 = int_to_ptr.vmem [resolvable:$true] %s31
      %37 = dma.hbm_to_vmem [thread:$0]  %s1, 12544, %s32, [#allocation6], 128, 128, 8
    $region9: #{tpu_custom_call.1} parent=1 // pred_fallthru
      _
    // Predicated region
    $region10: #{tpu_custom_call.1} parent=1 // pred_check
      _
    $region11: #{tpu_custom_call.1} parent=1 // pred_check_branch
      %39 = sbr.rel (0) target = $region13
    $region12: #{tpu_custom_call.1} parent=1 // pred_region
      _
    $region13: #{tpu_custom_call.1} parent=1 // pred_fallthru
      _
    // Predicated region
    $region14: #{tpu_custom_call.1} parent=1 // pred_check
      _
    $region15: #{tpu_custom_call.1} parent=1 // pred_check_branch
      %41 = sbr.rel (0) target = $region17
    $region16: #{tpu_custom_call.1} parent=1 // pred_region
      %s43 = ssub.s32 2048, 2048
      %44 = vsyncadd [#allocation6], %s43
      %s45 = sshll.u32 [#allocation7], 4
      %s46 = int_to_ptr.vmem [resolvable:$true] %s45
      %51 = dma.hbm_to_vmem [thread:$0]  %s3, 2048, %s46, [#allocation6], 128, 128, 8
    $region17: #{tpu_custom_call.1} parent=1 // pred_fallthru
      _
    // Predicated region
    $region18: #{tpu_custom_call.1} parent=1 // pred_check
      _
    $region19: #{tpu_custom_call.1} parent=1 // pred_check_branch
      %53 = sbr.rel (0) target = $region21
    $region20: #{tpu_custom_call.1} parent=1 // pred_region
      _
    $region21: #{tpu_custom_call.1} parent=1 // pred_fallthru
      _
    // Predicated region
    $region22: #{tpu_custom_call.1} parent=1 // pred_check
      _
    $region23: #{tpu_custom_call.1} parent=1 // pred_check_branch
      %55 = sbr.rel (0) target = $region25
    $region24: #{tpu_custom_call.1} parent=1 // pred_region
      %s57 = ssub.s32 2048, 2048
      %58 = vsyncadd [#allocation9], %s57
      %s59 = sshll.u32 [#allocation8], 4
      %s60 = int_to_ptr.vmem [resolvable:$true] %s59
      %65 = dma.hbm_to_vmem [thread:$0]  %s5, 2048, %s60, [#allocation9], 128, 128, 8
    $region25: #{tpu_custom_call.1} parent=1 // pred_fallthru
      _
    // Predicated region
    $region26: #{tpu_custom_call.1} parent=1 // pred_check
      _
    $region27: #{tpu_custom_call.1} parent=1 // pred_check_branch
      %67 = sbr.rel (0) target = $region29
    $region28: #{tpu_custom_call.1} parent=1 // pred_region
      _
    $region29: #{tpu_custom_call.1} parent=1 // pred_fallthru
      _
    // Predicated region
    $region30: #{tpu_custom_call.1} parent=1 // pred_check
      _
    $region31: #{tpu_custom_call.1} parent=1 // pred_check_branch
      %69 = sbr.rel (0) target = $region33
    $region32: #{tpu_custom_call.1} parent=1 // pred_region
      %70 = dma.done [#allocation3], 896
    $region33: #{tpu_custom_call.1} parent=1 // pred_fallthru
      _
    // Predicated region
    $region34: #{tpu_custom_call.1} parent=1 // pred_check
      _
    $region35: #{tpu_custom_call.1} parent=1 // pred_check_branch
      %72 = sbr.rel (0) target = $region37
    $region36: #{tpu_custom_call.1} parent=1 // pred_region
      %73 = dma.done [#allocation6], 12544
    $region37: #{tpu_custom_call.1} parent=1 // pred_fallthru
      _
    // Predicated region
    $region38: #{tpu_custom_call.1} parent=1 // pred_check
      _
    $region39: #{tpu_custom_call.1} parent=1 // pred_check_branch
      %75 = sbr.rel (0) target = $region41
    $region40: #{tpu_custom_call.1} parent=1 // pred_region
      %76 = dma.done [#allocation6], 2048
    $region41: #{tpu_custom_call.1} parent=1 // pred_fallthru
      _
    // Predicated region
    $region42: #{tpu_custom_call.1} parent=1 // pred_check
      _
    $region43: #{tpu_custom_call.1} parent=1 // pred_check_branch
      %78 = sbr.rel (0) target = $region45
    $region44: #{tpu_custom_call.1} parent=1 // pred_region
      %79 = dma.done [#allocation9], 2048
    $region45: #{tpu_custom_call.1} parent=1 // pred_fallthru
      _
    %v80 = vld [vmem:[#allocation2] sm:$0xff]
    %v81 = vld [vmem:[#allocation2 + $0x8] sm:$0xff]
    %v82 = vld [vmem:[#allocation2 + $0x10] sm:$0xff]
    %v83 = vld [vmem:[#allocation2 + $0x18] sm:$0xff]
    %v84 = vld [vmem:[#allocation2 + $0x20] sm:$0xff]
    %v85 = vld [vmem:[#allocation2 + $0x28] sm:$0xff]
    %v86 = vld [vmem:[#allocation2 + $0x30] sm:$0xff]
    %v87 = vld [vmem:[#allocation5] sm:$0xff]
    %v88 = vld [vmem:[#allocation5 + $0x8] sm:$0xff]
    %v89 = vld [vmem:[#allocation5 + $0x10] sm:$0xff]
    %v90 = vld [vmem:[#allocation5 + $0x18] sm:$0xff]
    %v91 = vld [vmem:[#allocation5 + $0x20] sm:$0xff]
    %v92 = vld [vmem:[#allocation5 + $0x28] sm:$0xff]
    %v93 = vld [vmem:[#allocation5 + $0x30] sm:$0xff]
    %v94 = vld [vmem:[#allocation5 + $0x38] sm:$0xff]
    %v95 = vld [vmem:[#allocation5 + $0x40] sm:$0xff]
    %v96 = vld [vmem:[#allocation5 + $0x48] sm:$0xff]
    %v97 = vld [vmem:[#allocation5 + $0x50] sm:$0xff]
    %v98 = vld [vmem:[#allocation5 + $0x58] sm:$0xff]
    %v99 = vld [vmem:[#allocation5 + $0x60] sm:$0xff]
    %v100 = vld [vmem:[#allocation5 + $0x68] sm:$0xff]
    %v101 = vld [vmem:[#allocation5 + $0x70] sm:$0xff]
    %v102 = vld [vmem:[#allocation5 + $0x78] sm:$0xff]
    %v103 = vld [vmem:[#allocation5 + $0x80] sm:$0xff]
    %v104 = vld [vmem:[#allocation5 + $0x88] sm:$0xff]
    %v105 = vld [vmem:[#allocation5 + $0x90] sm:$0xff]
    %v106 = vld [vmem:[#allocation5 + $0x98] sm:$0xff]
    %v107 = vld [vmem:[#allocation5 + $0xa0] sm:$0xff]
    %v108 = vld [vmem:[#allocation5 + $0xa8] sm:$0xff]
    %v109 = vld [vmem:[#allocation5 + $0xb0] sm:$0xff]
    %v110 = vld [vmem:[#allocation5 + $0xb8] sm:$0xff]
    %v111 = vld [vmem:[#allocation5 + $0xc0] sm:$0xff]
    %v112 = vld [vmem:[#allocation5 + $0xc8] sm:$0xff]
    %v113 = vld [vmem:[#allocation5 + $0xd0] sm:$0xff]
    %v114 = vld [vmem:[#allocation5 + $0xd8] sm:$0xff]
    %v115 = vld [vmem:[#allocation5 + $0xe0] sm:$0xff]
    %v116 = vld [vmem:[#allocation5 + $0xe8] sm:$0xff]
    %v117 = vld [vmem:[#allocation5 + $0xf0] sm:$0xff]
    %v118 = vld [vmem:[#allocation5 + $0xf8] sm:$0xff]
    %v119 = vld [vmem:[#allocation5 + $0x100] sm:$0xff]
    %v120 = vld [vmem:[#allocation5 + $0x108] sm:$0xff]
    %v121 = vld [vmem:[#allocation5 + $0x110] sm:$0xff]
    %v122 = vld [vmem:[#allocation5 + $0x118] sm:$0xff]
    %v123 = vld [vmem:[#allocation5 + $0x120] sm:$0xff]
    %v124 = vld [vmem:[#allocation5 + $0x128] sm:$0xff]
    %v125 = vld [vmem:[#allocation5 + $0x130] sm:$0xff]
    %v126 = vld [vmem:[#allocation5 + $0x138] sm:$0xff]
    %v127 = vld [vmem:[#allocation5 + $0x140] sm:$0xff]
    %v128 = vld [vmem:[#allocation5 + $0x148] sm:$0xff]
    %v129 = vld [vmem:[#allocation5 + $0x150] sm:$0xff]
    %v130 = vld [vmem:[#allocation5 + $0x158] sm:$0xff]
    %v131 = vld [vmem:[#allocation5 + $0x160] sm:$0xff]
    %v132 = vld [vmem:[#allocation5 + $0x168] sm:$0xff]
    %v133 = vld [vmem:[#allocation5 + $0x170] sm:$0xff]
    %v134 = vld [vmem:[#allocation5 + $0x178] sm:$0xff]
    %v135 = vld [vmem:[#allocation5 + $0x180] sm:$0xff]
    %v136 = vld [vmem:[#allocation5 + $0x188] sm:$0xff]
    %v137 = vld [vmem:[#allocation5 + $0x190] sm:$0xff]
    %v138 = vld [vmem:[#allocation5 + $0x198] sm:$0xff]
    %v139 = vld [vmem:[#allocation5 + $0x1a0] sm:$0xff]
    %v140 = vld [vmem:[#allocation5 + $0x1a8] sm:$0xff]
    %v141 = vld [vmem:[#allocation5 + $0x1b0] sm:$0xff]
    %v142 = vld [vmem:[#allocation5 + $0x1b8] sm:$0xff]
    %v143 = vld [vmem:[#allocation5 + $0x1c0] sm:$0xff]
    %v144 = vld [vmem:[#allocation5 + $0x1c8] sm:$0xff]
    %v145 = vld [vmem:[#allocation5 + $0x1d0] sm:$0xff]
    %v146 = vld [vmem:[#allocation5 + $0x1d8] sm:$0xff]
    %v147 = vld [vmem:[#allocation5 + $0x1e0] sm:$0xff]
    %v148 = vld [vmem:[#allocation5 + $0x1e8] sm:$0xff]
    %v149 = vld [vmem:[#allocation5 + $0x1f0] sm:$0xff]
    %v150 = vld [vmem:[#allocation5 + $0x1f8] sm:$0xff]
    %v151 = vld [vmem:[#allocation5 + $0x200] sm:$0xff]
    %v152 = vld [vmem:[#allocation5 + $0x208] sm:$0xff]
    %v153 = vld [vmem:[#allocation5 + $0x210] sm:$0xff]
    %v154 = vld [vmem:[#allocation5 + $0x218] sm:$0xff]
    %v155 = vld [vmem:[#allocation5 + $0x220] sm:$0xff]
    %v156 = vld [vmem:[#allocation5 + $0x228] sm:$0xff]
    %v157 = vld [vmem:[#allocation5 + $0x230] sm:$0xff]
    %v158 = vld [vmem:[#allocation5 + $0x238] sm:$0xff]
    %v159 = vld [vmem:[#allocation5 + $0x240] sm:$0xff]
    %v160 = vld [vmem:[#allocation5 + $0x248] sm:$0xff]
    %v161 = vld [vmem:[#allocation5 + $0x250] sm:$0xff]
    %v162 = vld [vmem:[#allocation5 + $0x258] sm:$0xff]
    %v163 = vld [vmem:[#allocation5 + $0x260] sm:$0xff]
    %v164 = vld [vmem:[#allocation5 + $0x268] sm:$0xff]
    %v165 = vld [vmem:[#allocation5 + $0x270] sm:$0xff]
    %v166 = vld [vmem:[#allocation5 + $0x278] sm:$0xff]
    %v167 = vld [vmem:[#allocation5 + $0x280] sm:$0xff]
    %v168 = vld [vmem:[#allocation5 + $0x288] sm:$0xff]
    %v169 = vld [vmem:[#allocation5 + $0x290] sm:$0xff]
    %v170 = vld [vmem:[#allocation5 + $0x298] sm:$0xff]
    %v171 = vld [vmem:[#allocation5 + $0x2a0] sm:$0xff]
    %v172 = vld [vmem:[#allocation5 + $0x2a8] sm:$0xff]
    %v173 = vld [vmem:[#allocation5 + $0x2b0] sm:$0xff]
    %v174 = vld [vmem:[#allocation5 + $0x2b8] sm:$0xff]
    %v175 = vld [vmem:[#allocation5 + $0x2c0] sm:$0xff]
    %v176 = vld [vmem:[#allocation5 + $0x2c8] sm:$0xff]
    %v177 = vld [vmem:[#allocation5 + $0x2d0] sm:$0xff]
    %v178 = vld [vmem:[#allocation5 + $0x2d8] sm:$0xff]
    %v179 = vld [vmem:[#allocation5 + $0x2e0] sm:$0xff]
    %v180 = vld [vmem:[#allocation5 + $0x2e8] sm:$0xff]
    %v181 = vld [vmem:[#allocation5 + $0x2f0] sm:$0xff]
    %v182 = vld [vmem:[#allocation5 + $0x2f8] sm:$0xff]
    %v183 = vld [vmem:[#allocation5 + $0x300] sm:$0xff]
    %v184 = vld [vmem:[#allocation5 + $0x308] sm:$0xff]
    %v185 = vld [vmem:[%s2] sm:$0x1]
    %v187 = vlaneseq
    %v188 = vshrl.u32 %v187, 7
    %v189 = vsub.s32 0, %v188
    %v190 = vrot.slane %v185, %v189
    %vm192 = vcmask 130048
    %v194 = vsel %vm192, %v86, 0
    %196 = vmatprep.subr.mxu0 0.0
    %197 = vmatpush1.msra.mxu0 %v102
    %198 = vmatprep.subr.mxu0 0.0
    %199 = vmatpush1.msra.mxu0 %v101
    %200 = vmatprep.subr.mxu0 0.0
    %201 = vmatpush1.msra.mxu0 %v100
    %202 = vmatprep.subr.mxu0 0.0
    %203 = vmatpush1.msra.mxu0 %v99
    %204 = vmatprep.subr.mxu0 0.0
    %205 = vmatpush1.msra.mxu0 %v98
    %206 = vmatprep.subr.mxu0 0.0
    %207 = vmatpush1.msra.mxu0 %v97
    %208 = vmatprep.subr.mxu0 0.0
    %209 = vmatpush1.msra.mxu0 %v96
    %210 = vmatprep.subr.mxu0 0.0
    %211 = vmatpush1.msra.mxu0 %v95
    %212 = vmatprep.subr.mxu0 0.0
    %213 = vmatpush1.msra.mxu0 %v94
    %214 = vmatprep.subr.mxu0 0.0
    %215 = vmatpush1.msra.mxu0 %v93
    %216 = vmatprep.subr.mxu0 0.0
    %217 = vmatpush1.msra.mxu0 %v92
    %218 = vmatprep.subr.mxu0 0.0
    %219 = vmatpush1.msra.mxu0 %v91
    %220 = vmatprep.subr.mxu0 0.0
    %221 = vmatpush1.msra.mxu0 %v90
    %222 = vmatprep.subr.mxu0 0.0
    %223 = vmatpush1.msra.mxu0 %v89
    %224 = vmatprep.subr.mxu0 0.0
    %225 = vmatpush1.msra.mxu0 %v88
    %226 = vmatprep.subr.mxu0 0.0
    %227 = vmatpush1.msra.mxu0 %v87
    %228 = vmatprep.subr.mxu0 0.0
    %229 = vmatpush2.msra.mxu0 %v118
    %230 = vmatprep.subr.mxu0 0.0
    %231 = vmatpush2.msra.mxu0 %v117
    %232 = vmatprep.subr.mxu0 0.0
    %233 = vmatpush2.msra.mxu0 %v116
    %234 = vmatprep.subr.mxu0 0.0
    %235 = vmatpush2.msra.mxu0 %v115
    %236 = vmatprep.subr.mxu0 0.0
    %237 = vmatpush2.msra.mxu0 %v114
    %238 = vmatprep.subr.mxu0 0.0
    %239 = vmatpush2.msra.mxu0 %v113
    %240 = vmatprep.subr.mxu0 0.0
    %241 = vmatpush2.msra.mxu0 %v112
    %242 = vmatprep.subr.mxu0 0.0
    %243 = vmatpush2.msra.mxu0 %v111
    %244 = vmatprep.subr.mxu0 0.0
    %245 = vmatpush2.msra.mxu0 %v110
    %246 = vmatprep.subr.mxu0 0.0
    %247 = vmatpush2.msra.mxu0 %v109
    %248 = vmatprep.subr.mxu0 0.0
    %249 = vmatpush2.msra.mxu0 %v108
    %250 = vmatprep.subr.mxu0 0.0
    %251 = vmatpush2.msra.mxu0 %v107
    %252 = vmatprep.subr.mxu0 0.0
    %253 = vmatpush2.msra.mxu0 %v106
    %254 = vmatprep.subr.mxu0 0.0
    %255 = vmatpush2.msra.mxu0 %v105
    %256 = vmatprep.subr.mxu0 0.0
    %257 = vmatpush2.msra.mxu0 %v104
    %258 = vmatprep.subr.mxu0 0.0
    %259 = vmatpush2.msra.mxu0 %v103
    %260 = vmatprep.mubr.f32.mxu0 %v81
    %261 = vmatmul.mubr.f32.gmra.mxu0 %v80
    %v262 = vpop.f32.mrf.mxu0
    %v263 = vadd.f32 %v190, %v262
    %v264 = vpop.f32.mrf.mxu0
    %265 = vdwg.mxu0
    %266 = vmatprep.subr.mxu0 0.0
    %267 = vmatpush1.msra.mxu0 %v134
    %268 = vmatprep.subr.mxu0 0.0
    %269 = vmatpush1.msra.mxu0 %v133
    %270 = vmatprep.subr.mxu0 0.0
    %271 = vmatpush1.msra.mxu0 %v132
    %272 = vmatprep.subr.mxu0 0.0
    %273 = vmatpush1.msra.mxu0 %v131
    %274 = vmatprep.subr.mxu0 0.0
    %275 = vmatpush1.msra.mxu0 %v130
    %276 = vmatprep.subr.mxu0 0.0
    %277 = vmatpush1.msra.mxu0 %v129
    %278 = vmatprep.subr.mxu0 0.0
    %279 = vmatpush1.msra.mxu0 %v128
    %280 = vmatprep.subr.mxu0 0.0
    %281 = vmatpush1.msra.mxu0 %v127
    %282 = vmatprep.subr.mxu0 0.0
    %283 = vmatpush1.msra.mxu0 %v126
    %284 = vmatprep.subr.mxu0 0.0
    %285 = vmatpush1.msra.mxu0 %v125
    %286 = vmatprep.subr.mxu0 0.0
    %287 = vmatpush1.msra.mxu0 %v124
    %288 = vmatprep.subr.mxu0 0.0
    %289 = vmatpush1.msra.mxu0 %v123
    %290 = vmatprep.subr.mxu0 0.0
    %291 = vmatpush1.msra.mxu0 %v122
    %292 = vmatprep.subr.mxu0 0.0
    %293 = vmatpush1.msra.mxu0 %v121
    %294 = vmatprep.subr.mxu0 0.0
    %295 = vmatpush1.msra.mxu0 %v120
    %296 = vmatprep.subr.mxu0 0.0
    %297 = vmatpush1.msra.mxu0 %v119
    %298 = vmatprep.subr.mxu0 0.0
    %299 = vmatpush2.msra.mxu0 %v150
    %300 = vmatprep.subr.mxu0 0.0
    %301 = vmatpush2.msra.mxu0 %v149
    %302 = vmatprep.subr.mxu0 0.0
    %303 = vmatpush2.msra.mxu0 %v148
    %304 = vmatprep.subr.mxu0 0.0
    %305 = vmatpush2.msra.mxu0 %v147
    %306 = vmatprep.subr.mxu0 0.0
    %307 = vmatpush2.msra.mxu0 %v146
    %308 = vmatprep.subr.mxu0 0.0
    %309 = vmatpush2.msra.mxu0 %v145
    %310 = vmatprep.subr.mxu0 0.0
    %311 = vmatpush2.msra.mxu0 %v144
    %312 = vmatprep.subr.mxu0 0.0
    %313 = vmatpush2.msra.mxu0 %v143
    %314 = vmatprep.subr.mxu0 0.0
    %315 = vmatpush2.msra.mxu0 %v142
    %316 = vmatprep.subr.mxu0 0.0
    %317 = vmatpush2.msra.mxu0 %v141
    %318 = vmatprep.subr.mxu0 0.0
    %319 = vmatpush2.msra.mxu0 %v140
    %320 = vmatprep.subr.mxu0 0.0
    %321 = vmatpush2.msra.mxu0 %v139
    %322 = vmatprep.subr.mxu0 0.0
    %323 = vmatpush2.msra.mxu0 %v138
    %324 = vmatprep.subr.mxu0 0.0
    %325 = vmatpush2.msra.mxu0 %v137
    %326 = vmatprep.subr.mxu0 0.0
    %327 = vmatpush2.msra.mxu0 %v136
    %328 = vmatprep.subr.mxu0 0.0
    %329 = vmatpush2.msra.mxu0 %v135
    %330 = vmatprep.mubr.f32.mxu0 %v83
    %331 = vmatmul.mubr.f32.gmra.mxu0 %v82
    %v332 = vpop.f32.mrf.mxu0
    %v333 = vadd.f32 %v263, %v332
    %v334 = vpop.f32.mrf.mxu0
    %335 = vdwg.mxu0
    %336 = vmatprep.subr.mxu0 0.0
    %337 = vmatpush1.msra.mxu0 %v166
    %338 = vmatprep.subr.mxu0 0.0
    %339 = vmatpush1.msra.mxu0 %v165
    %340 = vmatprep.subr.mxu0 0.0
    %341 = vmatpush1.msra.mxu0 %v164
    %342 = vmatprep.subr.mxu0 0.0
    %343 = vmatpush1.msra.mxu0 %v163
    %344 = vmatprep.subr.mxu0 0.0
    %345 = vmatpush1.msra.mxu0 %v162
    %346 = vmatprep.subr.mxu0 0.0
    %347 = vmatpush1.msra.mxu0 %v161
    %348 = vmatprep.subr.mxu0 0.0
    %349 = vmatpush1.msra.mxu0 %v160
    %350 = vmatprep.subr.mxu0 0.0
    %351 = vmatpush1.msra.mxu0 %v159
    %352 = vmatprep.subr.mxu0 0.0
    %353 = vmatpush1.msra.mxu0 %v158
    %354 = vmatprep.subr.mxu0 0.0
    %355 = vmatpush1.msra.mxu0 %v157
    %356 = vmatprep.subr.mxu0 0.0
    %357 = vmatpush1.msra.mxu0 %v156
    %358 = vmatprep.subr.mxu0 0.0
    %359 = vmatpush1.msra.mxu0 %v155
    %360 = vmatprep.subr.mxu0 0.0
    %361 = vmatpush1.msra.mxu0 %v154
    %362 = vmatprep.subr.mxu0 0.0
    %363 = vmatpush1.msra.mxu0 %v153
    %364 = vmatprep.subr.mxu0 0.0
    %365 = vmatpush1.msra.mxu0 %v152
    %366 = vmatprep.subr.mxu0 0.0
    %367 = vmatpush1.msra.mxu0 %v151
    %368 = vmatprep.subr.mxu0 0.0
    %369 = vmatpush2.msra.mxu0 %v182
    %370 = vmatprep.subr.mxu0 0.0
    %371 = vmatpush2.msra.mxu0 %v181
    %372 = vmatprep.subr.mxu0 0.0
    %373 = vmatpush2.msra.mxu0 %v180
    %374 = vmatprep.subr.mxu0 0.0
    %375 = vmatpush2.msra.mxu0 %v179
    %376 = vmatprep.subr.mxu0 0.0
    %377 = vmatpush2.msra.mxu0 %v178
    %378 = vmatprep.subr.mxu0 0.0
    %379 = vmatpush2.msra.mxu0 %v177
    %380 = vmatprep.subr.mxu0 0.0
    %381 = vmatpush2.msra.mxu0 %v176
    %382 = vmatprep.subr.mxu0 0.0
    %383 = vmatpush2.msra.mxu0 %v175
    %384 = vmatprep.subr.mxu0 0.0
    %385 = vmatpush2.msra.mxu0 %v174
    %386 = vmatprep.subr.mxu0 0.0
    %387 = vmatpush2.msra.mxu0 %v173
    %388 = vmatprep.subr.mxu0 0.0
    %389 = vmatpush2.msra.mxu0 %v172
    %390 = vmatprep.subr.mxu0 0.0
    %391 = vmatpush2.msra.mxu0 %v171
    %392 = vmatprep.subr.mxu0 0.0
    %393 = vmatpush2.msra.mxu0 %v170
    %394 = vmatprep.subr.mxu0 0.0
    %395 = vmatpush2.msra.mxu0 %v169
    %396 = vmatprep.subr.mxu0 0.0
    %397 = vmatpush2.msra.mxu0 %v168
    %398 = vmatprep.subr.mxu0 0.0
    %399 = vmatpush2.msra.mxu0 %v167
    %400 = vmatprep.mubr.f32.mxu0 %v85
    %401 = vmatmul.mubr.f32.gmra.mxu0 %v84
    %v402 = vpop.f32.mrf.mxu0
    %v403 = vadd.f32 %v333, %v402
    %v404 = vpop.f32.mrf.mxu0
    %405 = vdwg.mxu0
    %406 = vmatprep.subr.mxu0 0.0
    %407 = vmatpush1.msra.mxu0 0.0
    %408 = vmatprep.subr.mxu0 0.0
    %409 = vmatpush1.msra.mxu0 0.0
    %410 = vmatprep.subr.mxu0 0.0
    %411 = vmatpush1.msra.mxu0 0.0
    %412 = vmatprep.subr.mxu0 0.0
    %413 = vmatpush1.msra.mxu0 0.0
    %414 = vmatprep.subr.mxu0 0.0
    %415 = vmatpush1.msra.mxu0 0.0
    %416 = vmatprep.subr.mxu0 0.0
    %417 = vmatpush1.msra.mxu0 0.0
    %418 = vmatprep.subr.mxu0 0.0
    %419 = vmatpush1.msra.mxu0 0.0
    %420 = vmatprep.subr.mxu0 0.0
    %421 = vmatpush1.msra.mxu0 0.0
    %422 = vmatprep.subr.mxu0 0.0
    %423 = vmatpush1.msra.mxu0 0.0
    %424 = vmatprep.subr.mxu0 0.0
    %425 = vmatpush1.msra.mxu0 0.0
    %426 = vmatprep.subr.mxu0 0.0
    %427 = vmatpush1.msra.mxu0 0.0
    %428 = vmatprep.subr.mxu0 0.0
    %429 = vmatpush1.msra.mxu0 0.0
    %430 = vmatprep.subr.mxu0 0.0
    %431 = vmatpush1.msra.mxu0 0.0
    %432 = vmatprep.subr.mxu0 0.0
    %433 = vmatpush1.msra.mxu0 0.0
    %434 = vmatprep.subr.mxu0 0.0
    %435 = vmatpush1.msra.mxu0 %v184
    %436 = vmatprep.subr.mxu0 0.0
    %437 = vmatpush1.msra.mxu0 %v183
    %438 = vmatprep.subr.mxu0 0.0
    %439 = vmatpush2.msra.mxu0 0.0
    %440 = vmatprep.subr.mxu0 0.0
    %441 = vmatpush2.msra.mxu0 0.0
    %442 = vmatprep.subr.mxu0 0.0
    %443 = vmatpush2.msra.mxu0 0.0
    %444 = vmatprep.subr.mxu0 0.0
    %445 = vmatpush2.msra.mxu0 0.0
    %446 = vmatprep.subr.mxu0 0.0
    %447 = vmatpush2.msra.mxu0 0.0
    %448 = vmatprep.subr.mxu0 0.0
    %449 = vmatpush2.msra.mxu0 0.0
    %450 = vmatprep.subr.mxu0 0.0
    %451 = vmatpush2.msra.mxu0 0.0
    %452 = vmatprep.subr.mxu0 0.0
    %453 = vmatpush2.msra.mxu0 0.0
    %454 = vmatprep.subr.mxu0 0.0
    %455 = vmatpush2.msra.mxu0 0.0
    %456 = vmatprep.subr.mxu0 0.0
    %457 = vmatpush2.msra.mxu0 0.0
    %458 = vmatprep.subr.mxu0 0.0
    %459 = vmatpush2.msra.mxu0 0.0
    %460 = vmatprep.subr.mxu0 0.0
    %461 = vmatpush2.msra.mxu0 0.0
    %462 = vmatprep.subr.mxu0 0.0
    %463 = vmatpush2.msra.mxu0 0.0
    %464 = vmatprep.subr.mxu0 0.0
    %465 = vmatpush2.msra.mxu0 0.0
    %466 = vmatprep.subr.mxu0 0.0
    %467 = vmatpush2.msra.mxu0 0.0
    %468 = vmatprep.subr.mxu0 0.0
    %469 = vmatpush2.msra.mxu0 0.0
    %470 = vmatprep.mubr.f32.mxu0 0.0
    %471 = vmatmul.mubr.f32.gmra.mxu0 %v194
    %v472 = vpop.f32.mrf.mxu0
    %v473 = vadd.f32 %v403, %v472
    %v474 = vpop.f32.mrf.mxu0
    %475 = vdwg.mxu0
    %v476 = vmul.f32 %v473, 0.5
    %v477 = vtanh.pop %v476
    %v478 = vmul.f32 %v477, 0.5
    %v479 = vadd.f32 %v478, 0.5
    %v480 = vld [vmem:[#allocation7] sm:$0xff]
    %v481 = vld [vmem:[#allocation7 + $0x8] sm:$0xff]
    %v482 = vld [vmem:[#allocation7 + $0x10] sm:$0xff]
    %v483 = vld [vmem:[#allocation7 + $0x18] sm:$0xff]
    %v484 = vld [vmem:[#allocation7 + $0x20] sm:$0xff]
    %v485 = vld [vmem:[#allocation7 + $0x28] sm:$0xff]
    %v486 = vld [vmem:[#allocation7 + $0x30] sm:$0xff]
    %v487 = vld [vmem:[#allocation7 + $0x38] sm:$0xff]
    %v488 = vld [vmem:[#allocation7 + $0x40] sm:$0xff]
    %v489 = vld [vmem:[#allocation7 + $0x48] sm:$0xff]
    %v490 = vld [vmem:[#allocation7 + $0x50] sm:$0xff]
    %v491 = vld [vmem:[#allocation7 + $0x58] sm:$0xff]
    %v492 = vld [vmem:[#allocation7 + $0x60] sm:$0xff]
    %v493 = vld [vmem:[#allocation7 + $0x68] sm:$0xff]
    %v494 = vld [vmem:[#allocation7 + $0x70] sm:$0xff]
    %v495 = vld [vmem:[#allocation7 + $0x78] sm:$0xff]
    %v496 = vld [vmem:[%s4] sm:$0x1]
    %v498 = vlaneseq
    %v499 = vshrl.u32 %v498, 7
    %v500 = vsub.s32 0, %v499
    %v501 = vrot.slane %v496, %v500
    %503 = vmatprep.subr.mxu0 0.0
    %504 = vmatpush1.msra.mxu0 %v495
    %505 = vmatprep.subr.mxu0 0.0
    %506 = vmatpush1.msra.mxu0 %v494
    %507 = vmatprep.subr.mxu0 0.0
    %508 = vmatpush1.msra.mxu0 %v493
    %509 = vmatprep.subr.mxu0 0.0
    %510 = vmatpush1.msra.mxu0 %v492
    %511 = vmatprep.subr.mxu0 0.0
    %512 = vmatpush1.msra.mxu0 %v491
    %513 = vmatprep.subr.mxu0 0.0
    %514 = vmatpush1.msra.mxu0 %v490
    %515 = vmatprep.subr.mxu0 0.0
    %516 = vmatpush1.msra.mxu0 %v489
    %517 = vmatprep.subr.mxu0 0.0
    %518 = vmatpush1.msra.mxu0 %v488
    %519 = vmatprep.subr.mxu0 0.0
    %520 = vmatpush1.msra.mxu0 %v487
    %521 = vmatprep.subr.mxu0 0.0
    %522 = vmatpush1.msra.mxu0 %v486
    %523 = vmatprep.subr.mxu0 0.0
    %524 = vmatpush1.msra.mxu0 %v485
    %525 = vmatprep.subr.mxu0 0.0
    %526 = vmatpush1.msra.mxu0 %v484
    %527 = vmatprep.subr.mxu0 0.0
    %528 = vmatpush1.msra.mxu0 %v483
    %529 = vmatprep.subr.mxu0 0.0
    %530 = vmatpush1.msra.mxu0 %v482
    %531 = vmatprep.subr.mxu0 0.0
    %532 = vmatpush1.msra.mxu0 %v481
    %533 = vmatprep.subr.mxu0 0.0
    %534 = vmatpush1.msra.mxu0 %v480
    %535 = vmatprep.subr.mxu0 0.0
    %536 = vmatpush2.msra.mxu0 0.0
    %537 = vmatprep.subr.mxu0 0.0
    %538 = vmatpush2.msra.mxu0 0.0
    %539 = vmatprep.subr.mxu0 0.0
    %540 = vmatpush2.msra.mxu0 0.0
    %541 = vmatprep.subr.mxu0 0.0
    %542 = vmatpush2.msra.mxu0 0.0
    %543 = vmatprep.subr.mxu0 0.0
    %544 = vmatpush2.msra.mxu0 0.0
    %545 = vmatprep.subr.mxu0 0.0
    %546 = vmatpush2.msra.mxu0 0.0
    %547 = vmatprep.subr.mxu0 0.0
    %548 = vmatpush2.msra.mxu0 0.0
    %549 = vmatprep.subr.mxu0 0.0
    %550 = vmatpush2.msra.mxu0 0.0
    %551 = vmatprep.subr.mxu0 0.0
    %552 = vmatpush2.msra.mxu0 0.0
    %553 = vmatprep.subr.mxu0 0.0
    %554 = vmatpush2.msra.mxu0 0.0
    %555 = vmatprep.subr.mxu0 0.0
    %556 = vmatpush2.msra.mxu0 0.0
    %557 = vmatprep.subr.mxu0 0.0
    %558 = vmatpush2.msra.mxu0 0.0
    %559 = vmatprep.subr.mxu0 0.0
    %560 = vmatpush2.msra.mxu0 0.0
    %561 = vmatprep.subr.mxu0 0.0
    %562 = vmatpush2.msra.mxu0 0.0
    %563 = vmatprep.subr.mxu0 0.0
    %564 = vmatpush2.msra.mxu0 0.0
    %565 = vmatprep.subr.mxu0 0.0
    %566 = vmatpush2.msra.mxu0 0.0
    %567 = vmatprep.mubr.f32.mxu0 0.0
    %568 = vmatmul.mubr.f32.gmra.mxu0 %v479
    %v569 = vpop.f32.mrf.mxu0
    %v570 = vadd.f32 %v501, %v569
    %v571 = vpop.f32.mrf.mxu0
    %572 = vdwg.mxu0
    %v573 = vmul.f32 %v570, 0.5
    %v574 = vtanh.pop %v573
    %v575 = vmul.f32 %v574, 0.5
    %v576 = vadd.f32 %v575, 0.5
    %v577 = vld [vmem:[#allocation8] sm:$0xff]
    %v578 = vld [vmem:[#allocation8 + $0x8] sm:$0xff]
    %v579 = vld [vmem:[#allocation8 + $0x10] sm:$0xff]
    %v580 = vld [vmem:[#allocation8 + $0x18] sm:$0xff]
    %v581 = vld [vmem:[#allocation8 + $0x20] sm:$0xff]
    %v582 = vld [vmem:[#allocation8 + $0x28] sm:$0xff]
    %v583 = vld [vmem:[#allocation8 + $0x30] sm:$0xff]
    %v584 = vld [vmem:[#allocation8 + $0x38] sm:$0xff]
    %v585 = vld [vmem:[#allocation8 + $0x40] sm:$0xff]
    %v586 = vld [vmem:[#allocation8 + $0x48] sm:$0xff]
    %v587 = vld [vmem:[#allocation8 + $0x50] sm:$0xff]
    %v588 = vld [vmem:[#allocation8 + $0x58] sm:$0xff]
    %v589 = vld [vmem:[#allocation8 + $0x60] sm:$0xff]
    %v590 = vld [vmem:[#allocation8 + $0x68] sm:$0xff]
    %v591 = vld [vmem:[#allocation8 + $0x70] sm:$0xff]
    %v592 = vld [vmem:[#allocation8 + $0x78] sm:$0xff]
    %v593 = vld [vmem:[%s6] sm:$0x1]
    %v595 = vlaneseq
    %v596 = vshrl.u32 %v595, 7
    %v597 = vsub.s32 0, %v596
    %v598 = vrot.slane %v593, %v597
    %600 = vmatprep.subr.mxu0 0.0
    %601 = vmatpush1.msra.mxu0 %v592
    %602 = vmatprep.subr.mxu0 0.0
    %603 = vmatpush1.msra.mxu0 %v591
    %604 = vmatprep.subr.mxu0 0.0
    %605 = vmatpush1.msra.mxu0 %v590
    %606 = vmatprep.subr.mxu0 0.0
    %607 = vmatpush1.msra.mxu0 %v589
    %608 = vmatprep.subr.mxu0 0.0
    %609 = vmatpush1.msra.mxu0 %v588
    %610 = vmatprep.subr.mxu0 0.0
    %611 = vmatpush1.msra.mxu0 %v587
    %612 = vmatprep.subr.mxu0 0.0
    %613 = vmatpush1.msra.mxu0 %v586
    %614 = vmatprep.subr.mxu0 0.0
    %615 = vmatpush1.msra.mxu0 %v585
    %616 = vmatprep.subr.mxu0 0.0
    %617 = vmatpush1.msra.mxu0 %v584
    %618 = vmatprep.subr.mxu0 0.0
    %619 = vmatpush1.msra.mxu0 %v583
    %620 = vmatprep.subr.mxu0 0.0
    %621 = vmatpush1.msra.mxu0 %v582
    %622 = vmatprep.subr.mxu0 0.0
    %623 = vmatpush1.msra.mxu0 %v581
    %624 = vmatprep.subr.mxu0 0.0
    %625 = vmatpush1.msra.mxu0 %v580
    %626 = vmatprep.subr.mxu0 0.0
    %627 = vmatpush1.msra.mxu0 %v579
    %628 = vmatprep.subr.mxu0 0.0
    %629 = vmatpush1.msra.mxu0 %v578
    %630 = vmatprep.subr.mxu0 0.0
    %631 = vmatpush1.msra.mxu0 %v577
    %632 = vmatprep.subr.mxu0 0.0
    %633 = vmatpush2.msra.mxu0 0.0
    %634 = vmatprep.subr.mxu0 0.0
    %635 = vmatpush2.msra.mxu0 0.0
    %636 = vmatprep.subr.mxu0 0.0
    %637 = vmatpush2.msra.mxu0 0.0
    %638 = vmatprep.subr.mxu0 0.0
    %639 = vmatpush2.msra.mxu0 0.0
    %640 = vmatprep.subr.mxu0 0.0
    %641 = vmatpush2.msra.mxu0 0.0
    %642 = vmatprep.subr.mxu0 0.0
    %643 = vmatpush2.msra.mxu0 0.0
    %644 = vmatprep.subr.mxu0 0.0
    %645 = vmatpush2.msra.mxu0 0.0
    %646 = vmatprep.subr.mxu0 0.0
    %647 = vmatpush2.msra.mxu0 0.0
    %648 = vmatprep.subr.mxu0 0.0
    %649 = vmatpush2.msra.mxu0 0.0
    %650 = vmatprep.subr.mxu0 0.0
    %651 = vmatpush2.msra.mxu0 0.0
    %652 = vmatprep.subr.mxu0 0.0
    %653 = vmatpush2.msra.mxu0 0.0
    %654 = vmatprep.subr.mxu0 0.0
    %655 = vmatpush2.msra.mxu0 0.0
    %656 = vmatprep.subr.mxu0 0.0
    %657 = vmatpush2.msra.mxu0 0.0
    %658 = vmatprep.subr.mxu0 0.0
    %659 = vmatpush2.msra.mxu0 0.0
    %660 = vmatprep.subr.mxu0 0.0
    %661 = vmatpush2.msra.mxu0 0.0
    %662 = vmatprep.subr.mxu0 0.0
    %663 = vmatpush2.msra.mxu0 0.0
    %664 = vmatprep.mubr.f32.mxu0 0.0
    %665 = vmatmul.mubr.f32.gmra.mxu0 %v576
    %v666 = vpop.f32.mrf.mxu0
    %v667 = vadd.f32 %v598, %v666
    %v668 = vpop.f32.mrf.mxu0
    %669 = vdwg.mxu0
    %v670 = vmul.f32 %v667, 0.5
    %v671 = vtanh.pop %v670
    %v672 = vmul.f32 %v671, 0.5
    %v673 = vadd.f32 %v672, 0.5
    %674 = vst [vmem:[#allocation10] sm:$0xff] %v673
    // Predicated region
    $region46: #{tpu_custom_call.1} parent=1 // pred_check
      _
    $region47: #{tpu_custom_call.1} parent=1 // pred_check_branch
      %676 = sbr.rel (0) target = $region49
    $region48: #{tpu_custom_call.1} parent=1 // pred_region
      %s678 = ssub.s32 128, 128
      %679 = vsyncadd [#allocation4], %s678
      %s681 = sshll.u32 [#allocation10], 4
      %s682 = int_to_ptr.vmem [resolvable:$true] %s681
      %684 = dma.vmem_to_hbm [thread:$0]  %s682, 128, %s7, [#allocation4]
    $region49: #{tpu_custom_call.1} parent=1 // pred_fallthru
      _
    // Predicated region
    $region50: #{tpu_custom_call.1} parent=1 // pred_check
      _
    $region51: #{tpu_custom_call.1} parent=1 // pred_check_branch
      %686 = sbr.rel (0) target = $region53
    $region52: #{tpu_custom_call.1} parent=1 // pred_region
      %687 = dma.done [#allocation4], 128
    $region53: #{tpu_custom_call.1} parent=1 // pred_fallthru
      _
    %688 = vsyncpa [#allocation3], 1
    %689 = vsyncpa [#allocation6], 1
    %690 = vsyncpa [#allocation9], 1
    %691 = vsyncpa [#allocation4], 1

</llo_original>
